<compile_context>
chip_gen: v7x
topology: tpu7x:2x2x1
jax: 0.10.0
libtpu: 0.0.40
codegen_flags: <defaults>
</compile_context>

<pallas_src>
import functools

import numpy as np
import jax
import jax.numpy as jnp
from jax import lax
from jax.experimental import pallas as pl
from jax.experimental.pallas import tpu as pltpu

BN_EPS = 1e-5


def get_sinusoid_encoding_table(n_posX, d_hid, padding_idx=None):
    """Faithful port of the PyTorch helper (returns (1, d_hid, n_pos, n_pos))."""
    d_hid = d_hid // 2
    n_posY = n_posX

    def cal_angle(position, hid_idx):
        return position / np.power(10000, 2 * (hid_idx // 2) / d_hid)

    def get_posi_angle_vec(position):
        return [cal_angle(position, hid_j) for hid_j in range(d_hid)]

    tX = np.array([get_posi_angle_vec(p) for p in range(n_posX)])
    tY = np.array([get_posi_angle_vec(p) for p in range(n_posY)])
    tX[:, 0::2] = np.sin(tX[:, 0::2]); tX[:, 1::2] = np.cos(tX[:, 1::2])
    tY[:, 0::2] = np.sin(tY[:, 0::2]); tY[:, 1::2] = np.cos(tY[:, 1::2])
    tX = tX.transpose(); tY = tY.transpose()
    tX = np.expand_dims(tX, axis=2); tY = np.expand_dims(tY, axis=1)
    tX = np.repeat(tX, n_posY, axis=2); tY = np.repeat(tY, n_posX, axis=1)
    table = np.concatenate([tX, tY], axis=0)
    if padding_idx is not None:
        table[padding_idx, padding_idx] = 0.0
    return np.expand_dims(table, axis=0).astype(np.float32)  # (1, d_hid*2, H, W)


def _nlblock_kernel(x_full_ref, x_q_ref, pos_full_ref, pos_q_ref,
                    w_kv_ref, w_th_ref, w_z_ref, o_ref,
                    *, num_c, hw_real, hw_pad):
    bf16 = jnp.bfloat16

    # --- key-side slab: pos add + fused pi/g projection (one MXU matmul) ------
    xk = x_full_ref[0] + pos_full_ref[...]                    # (C, HWp) f32
    kv = jnp.dot(w_kv_ref[...].astype(bf16), xk.astype(bf16),
                 preferred_element_type=jnp.float32)          # (2*nc, HWp) f32
    pi = kv[:num_c].astype(bf16)                              # (nc, HWp)
    g = kv[num_c:].astype(bf16)                               # (nc, HWp)

    # --- query-side slab: pos add + theta projection --------------------------
    xq = x_q_ref[0] + pos_q_ref[...]                          # (C, TQ) f32
    theta = jnp.dot(w_th_ref[...].astype(bf16), xq.astype(bf16),
                    preferred_element_type=jnp.float32).astype(bf16)  # (nc, TQ)

    # --- attention scores: (TQ, HWp) = theta^T @ pi (contract channel axis) ---
    # Only the small (nc, TQ) operand ever needs a relayout.
    att = lax.dot_general(theta, pi, (((0,), (0,)), ((), ())),
                          preferred_element_type=jnp.float32)

    if hw_pad != hw_real:  # mask padded key columns (static branch)
        key_idx = lax.broadcasted_iota(jnp.int32, att.shape, 1)
        att = jnp.where(key_idx < hw_real, att, -1e30)

    # --- softmax with deferred normalization ---------------------------------
    m = jnp.max(att, axis=-1, keepdims=True)                  # (TQ, 1)
    e = jnp.exp(att - m)                                      # (TQ, HWp) f32
    denom = jnp.sum(e, axis=-1, keepdims=True)                # (TQ, 1)

    # PV: (TQ, nc) = e @ g^T  -- big matrix contracts on its last dim.
    out_q = lax.dot_general(e.astype(bf16), g, (((1,), (1,)), ((), ())),
                            preferred_element_type=jnp.float32)
    out_q = out_q * pl.reciprocal(denom, approx=True)         # EUP reciprocal

    # z projection (BN scale already folded into w_z): (C, TQ).
    z = lax.dot_general(w_z_ref[...].astype(bf16), out_q.astype(bf16),
                        (((1,), (1,)), ((), ())),
                        preferred_element_type=jnp.float32)

    o_ref[0] = xq + z                                         # residual = x + pos


def nlblock_forward(x_nchw, pos_table, w_theta, w_pi, w_g, w_z, *, q_tile=None):
    B, C, H, W = x_nchw.shape
    hw = H * W
    num_c = w_theta.shape[0]

    hw_pad = ((hw + 127) // 128) * 128          # lane-dense spatial axis
    if q_tile is None:
        q_tile = min(hw_pad, 512)
    assert q_tile % 128 == 0 and hw_pad % q_tile == 0
    n_q = hw_pad // q_tile

    x_flat = x_nchw.reshape(B, C, hw).astype(jnp.float32)
    pos_flat = pos_table.reshape(C, hw).astype(jnp.float32)
    if hw_pad != hw:
        x_flat = jnp.pad(x_flat, ((0, 0), (0, 0), (0, hw_pad - hw)))
        pos_flat = jnp.pad(pos_flat, ((0, 0), (0, hw_pad - hw)))

    # Fuse key-side projection weights; fold eval-mode BN scale into w_z.
    w_kv = jnp.concatenate([w_pi, w_g], axis=0).astype(jnp.float32)   # (2*nc, C)
    w_z_s = (w_z * (1.0 / np.sqrt(1.0 + BN_EPS))).astype(jnp.float32)  # (C, nc)
    w_th = w_theta.astype(jnp.float32)

    kernel = functools.partial(_nlblock_kernel, num_c=num_c,
                               hw_real=hw, hw_pad=hw_pad)

    out = pl.pallas_call(
        kernel,
        out_shape=jax.ShapeDtypeStruct((B, C, hw_pad), jnp.float32),
        grid_spec=pltpu.PrefetchScalarGridSpec(
            num_scalar_prefetch=0,
            grid=(B, n_q),
            in_specs=[
                pl.BlockSpec((1, C, hw_pad), lambda b, q: (b, 0, 0)),  # x (keys)
                pl.BlockSpec((1, C, q_tile), lambda b, q: (b, 0, q)),  # x (query tile)
                pl.BlockSpec((C, hw_pad), lambda b, q: (0, 0)),        # pos (keys)
                pl.BlockSpec((C, q_tile), lambda b, q: (0, q)),        # pos (query tile)
                pl.BlockSpec((2 * num_c, C), lambda b, q: (0, 0)),     # W_pi|W_g fused
                pl.BlockSpec((num_c, C), lambda b, q: (0, 0)),         # W_theta
                pl.BlockSpec((C, num_c), lambda b, q: (0, 0)),         # W_z (BN folded)
            ],
            out_specs=pl.BlockSpec((1, C, q_tile), lambda b, q: (b, 0, q)),
        ),
        compiler_params=pltpu.CompilerParams(
            dimension_semantics=("parallel", "parallel"),
            vmem_limit_bytes=64 * 1024 * 1024),
    )(x_flat, x_flat, pos_flat, pos_flat, w_kv, w_th, w_z_s)

    return out[:, :, :hw].reshape(B, C, H, W)


def nlblock_reference(x_nchw, pos_table, w_theta, w_pi, w_g, w_z):
    """Pure-JAX (f32) reference mirroring the PyTorch forward."""
    B, C, H, W = x_nchw.shape
    HW = H * W
    xp = (x_nchw + pos_table).reshape(B, C, HW)
    theta = jnp.einsum('oc,bcs->bos', w_theta, xp)
    pi = jnp.einsum('oc,bcs->bos', w_pi, xp)
    g = jnp.einsum('oc,bcs->bos', w_g, xp)
    att = jnp.einsum('bcq,bck->bqk', theta, pi)
    att = jax.nn.softmax(att, axis=-1)
    out = jnp.einsum('bqk,bck->bcq', att, g)
    z = jnp.einsum('oc,bcs->bos', w_z, out)
    z = z / jnp.sqrt(1.0 + BN_EPS)
    return (xp + z).reshape(B, C, H, W)


if __name__ == "__main__":
    # Small shapes consistent with the module: NCHW input, H == W == args.pos_x.
    B, C, H, W = 2, 16, 16, 16
    num_head = 1
    num_c = C // 2                      # num_c == -1 default -> in_dim // 2

    key = jax.random.PRNGKey(0)
    kx, kt, kp, kg, kz = jax.random.split(key, 5)
    x = jax.random.normal(kx, (B, C, H, W), dtype=jnp.float32)

    # Deterministic conv weights ~ N(0, 0.01) (cinit=0.01 semantics), 1x1 kernels
    # stored as (out_channels, in_channels).
    w_theta = 0.01 * jax.random.normal(kt, (num_c * num_head, C), dtype=jnp.float32)
    w_pi    = 0.01 * jax.random.normal(kp, (num_c * num_head, C), dtype=jnp.float32)
    w_g     = 0.01 * jax.random.normal(kg, (num_c * num_head, C), dtype=jnp.float32)
    w_z     = 0.01 * jax.random.normal(kz, (C, num_c * num_head), dtype=jnp.float32)

    pos_table = jnp.asarray(get_sinusoid_encoding_table(H, C))[0]   # (C, H, W)

    # q_tile=128 -> grid (B=2, n_q=2): exercises both the batch and query-tile
    # grid axes (and gives v7x two parallel ways even at small B).
    y = nlblock_forward(x, pos_table, w_theta, w_pi, w_g, w_z, q_tile=128)
    y = jax.block_until_ready(y)

    y_ref = nlblock_reference(x, pos_table, w_theta, w_pi, w_g, w_z)
    # bf16 MXU operands -> loosened tolerance vs the f32 reference.
    np.testing.assert_allclose(np.asarray(y), np.asarray(y_ref),
                               rtol=1e-2, atol=2e-3)

    print("KERNEL_OK")
</pallas_src>

<mosaic_0001>
module attributes {stable_mosaic.version = 11 : i64} {
  func.func @_nlblock_kernel(%arg0: i32, %arg1: i32, %arg2: memref<1x16x256xf32, #tpu.memory_space<vmem>>, %arg3: memref<1x16x128xf32, #tpu.memory_space<vmem>>, %arg4: memref<16x256xf32, #tpu.memory_space<vmem>>, %arg5: memref<16x128xf32, #tpu.memory_space<vmem>>, %arg6: memref<16x16xf32, #tpu.memory_space<vmem>>, %arg7: memref<8x16xf32, #tpu.memory_space<vmem>>, %arg8: memref<16x8xf32, #tpu.memory_space<vmem>>, %arg9: memref<1x16x128xf32, #tpu.memory_space<vmem>>) attributes {dimension_semantics = [#tpu.dimension_semantics<parallel>, #tpu.dimension_semantics<parallel>], iteration_bounds = array<i64: 2, 2>, scalar_prefetch = 0 : i64, scratch_operands = 0 : i64, tpu.core_type = #tpu.core_type<tc>, window_params = [{transform_indices = @transform_0, window_bounds = array<i64: 1, 16, 256>}, {transform_indices = @transform_1, window_bounds = array<i64: 1, 16, 128>}, {pipeline_mode = #tpu.pipeline_mode<synchronous>, transform_indices = @transform_2, window_bounds = array<i64: 16, 256>}, {transform_indices = @transform_3, window_bounds = array<i64: 16, 128>}, {pipeline_mode = #tpu.pipeline_mode<synchronous>, transform_indices = @transform_4, window_bounds = array<i64: 16, 16>}, {pipeline_mode = #tpu.pipeline_mode<synchronous>, transform_indices = @transform_5, window_bounds = array<i64: 8, 16>}, {pipeline_mode = #tpu.pipeline_mode<synchronous>, transform_indices = @transform_6, window_bounds = array<i64: 16, 8>}, {transform_indices = @transform_7, window_bounds = array<i64: 1, 16, 128>}]} {
    %c0 = arith.constant 0 : index
    %c0_0 = arith.constant 0 : index
    %c0_1 = arith.constant 0 : index
    %0 = vector.load %arg2[%c0, %c0_0, %c0_1] : memref<1x16x256xf32, #tpu.memory_space<vmem>>, vector<1x16x256xf32>
    %1 = vector.shape_cast %0 : vector<1x16x256xf32> to vector<16x256xf32>
    %c0_2 = arith.constant 0 : index
    %c0_3 = arith.constant 0 : index
    %2 = vector.load %arg4[%c0_2, %c0_3] : memref<16x256xf32, #tpu.memory_space<vmem>>, vector<16x256xf32>
    %3 = arith.addf %1, %2 : vector<16x256xf32>
    %c0_4 = arith.constant 0 : index
    %c0_5 = arith.constant 0 : index
    %4 = vector.load %arg6[%c0_4, %c0_5] : memref<16x16xf32, #tpu.memory_space<vmem>>, vector<16x16xf32>
    %5 = arith.truncf %4 : vector<16x16xf32> to vector<16x16xbf16>
    %6 = arith.truncf %3 : vector<16x256xf32> to vector<16x256xbf16>
    %cst = arith.constant dense<0.000000e+00> : vector<16x256xf32>
    %7 = tpu.matmul %5, %6, %cst {dimension_numbers = #tpu.dot_dimension_numbers<[1], [0], [0], [1], [0, 0, 1, 1], [], []>} : vector<16x16xbf16>, vector<16x256xbf16>, vector<16x256xf32> -> vector<16x256xf32>
    %8 = vector.extract_strided_slice %7 {offsets = [0, 0], sizes = [8, 256], strides = [1, 1]} : vector<16x256xf32> to vector<8x256xf32>
    %9 = arith.truncf %8 : vector<8x256xf32> to vector<8x256xbf16>
    %10 = vector.extract_strided_slice %7 {offsets = [8, 0], sizes = [8, 256], strides = [1, 1]} : vector<16x256xf32> to vector<8x256xf32>
    %11 = arith.truncf %10 : vector<8x256xf32> to vector<8x256xbf16>
    %c0_6 = arith.constant 0 : index
    %c0_7 = arith.constant 0 : index
    %c0_8 = arith.constant 0 : index
    %12 = vector.load %arg3[%c0_6, %c0_7, %c0_8] : memref<1x16x128xf32, #tpu.memory_space<vmem>>, vector<1x16x128xf32>
    %13 = vector.shape_cast %12 : vector<1x16x128xf32> to vector<16x128xf32>
    %c0_9 = arith.constant 0 : index
    %c0_10 = arith.constant 0 : index
    %14 = vector.load %arg5[%c0_9, %c0_10] : memref<16x128xf32, #tpu.memory_space<vmem>>, vector<16x128xf32>
    %15 = arith.addf %13, %14 : vector<16x128xf32>
    %c0_11 = arith.constant 0 : index
    %c0_12 = arith.constant 0 : index
    %16 = vector.load %arg7[%c0_11, %c0_12] : memref<8x16xf32, #tpu.memory_space<vmem>>, vector<8x16xf32>
    %17 = arith.truncf %16 : vector<8x16xf32> to vector<8x16xbf16>
    %18 = arith.truncf %15 : vector<16x128xf32> to vector<16x128xbf16>
    %cst_13 = arith.constant dense<0.000000e+00> : vector<8x128xf32>
    %19 = tpu.matmul %17, %18, %cst_13 {dimension_numbers = #tpu.dot_dimension_numbers<[1], [0], [0], [1], [0, 0, 1, 1], [], []>} : vector<8x16xbf16>, vector<16x128xbf16>, vector<8x128xf32> -> vector<8x128xf32>
    %20 = arith.truncf %19 : vector<8x128xf32> to vector<8x128xbf16>
    %cst_14 = arith.constant dense<0.000000e+00> : vector<128x256xf32>
    %21 = tpu.matmul %20, %9, %cst_14 {dimension_numbers = #tpu.dot_dimension_numbers<[0], [0], [1], [1], [0, 1, 1, 1], [], []>} : vector<8x128xbf16>, vector<8x256xbf16>, vector<128x256xf32> -> vector<128x256xf32>
    %cst_15 = arith.constant dense<0xFF800000> : vector<128xf32>
    %22 = vector.multi_reduction <maximumf>, %21, %cst_15 [1] : vector<128x256xf32> to vector<128xf32>
    %23 = vector.shape_cast %22 : vector<128xf32> to vector<128x1xf32>
    %24 = vector.broadcast %23 : vector<128x1xf32> to vector<128x256xf32>
    %25 = arith.subf %21, %24 : vector<128x256xf32>
    %26 = math.exp %25 : vector<128x256xf32>
    %cst_16 = arith.constant dense<0.000000e+00> : vector<128xf32>
    %27 = vector.multi_reduction <add>, %26, %cst_16 [1] : vector<128x256xf32> to vector<128xf32>
    %28 = vector.shape_cast %27 : vector<128xf32> to vector<128x1xf32>
    %29 = arith.truncf %26 : vector<128x256xf32> to vector<128x256xbf16>
    %cst_17 = arith.constant dense<0.000000e+00> : vector<128x8xf32>
    %30 = tpu.matmul %29, %11, %cst_17 {dimension_numbers = #tpu.dot_dimension_numbers<[1], [1], [0], [0], [0, 0, 1, 0], [], []>} : vector<128x256xbf16>, vector<8x256xbf16>, vector<128x8xf32> -> vector<128x8xf32>
    %31 = tpu.reciprocal %28 {approx = true} : vector<128x1xf32> -> vector<128x1xf32>
    %32 = vector.broadcast %31 : vector<128x1xf32> to vector<128x8xf32>
    %33 = arith.mulf %30, %32 : vector<128x8xf32>
    %c0_18 = arith.constant 0 : index
    %c0_19 = arith.constant 0 : index
    %34 = vector.load %arg8[%c0_18, %c0_19] : memref<16x8xf32, #tpu.memory_space<vmem>>, vector<16x8xf32>
    %35 = arith.truncf %34 : vector<16x8xf32> to vector<16x8xbf16>
    %36 = arith.truncf %33 : vector<128x8xf32> to vector<128x8xbf16>
    %cst_20 = arith.constant dense<0.000000e+00> : vector<16x128xf32>
    %37 = tpu.matmul %35, %36, %cst_20 {dimension_numbers = #tpu.dot_dimension_numbers<[1], [1], [0], [0], [0, 0, 1, 0], [], []>} : vector<16x8xbf16>, vector<128x8xbf16>, vector<16x128xf32> -> vector<16x128xf32>
    %38 = arith.addf %15, %37 : vector<16x128xf32>
    %c0_21 = arith.constant 0 : index
    %c0_22 = arith.constant 0 : index
    %c0_23 = arith.constant 0 : index
    %39 = vector.load %arg9[%c0_21, %c0_22, %c0_23] : memref<1x16x128xf32, #tpu.memory_space<vmem>>, vector<1x16x128xf32>
    %40 = vector.shape_cast %39 : vector<1x16x128xf32> to vector<16x128xf32>
    %41 = vector.shape_cast %38 : vector<16x128xf32> to vector<1x16x128xf32>
    tpu.vector_store %arg9[%c0_21, %c0_22, %c0_23], %41 {strides = array<i32>} : memref<1x16x128xf32, #tpu.memory_space<vmem>>, vector<1x16x128xf32>,
    return
  }
  func.func @transform_0(%arg0: i32, %arg1: i32) -> (i32, i32, i32) {
    %c0_i32 = arith.constant 0 : i32
    %c0_i32_0 = arith.constant 0 : i32
    %c0_i32_1 = arith.constant 0 : i32
    return %arg0, %c0_i32, %c0_i32_0 : i32, i32, i32
  }
  func.func @transform_1(%arg0: i32, %arg1: i32) -> (i32, i32, i32) {
    %c0_i32 = arith.constant 0 : i32
    %c0_i32_0 = arith.constant 0 : i32
    return %arg0, %c0_i32, %arg1 : i32, i32, i32
  }
  func.func @transform_2(%arg0: i32, %arg1: i32) -> (i32, i32) {
    %c0_i32 = arith.constant 0 : i32
    %c0_i32_0 = arith.constant 0 : i32
    %c0_i32_1 = arith.constant 0 : i32
    return %c0_i32, %c0_i32_0 : i32, i32
  }
  func.func @transform_3(%arg0: i32, %arg1: i32) -> (i32, i32) {
    %c0_i32 = arith.constant 0 : i32
    %c0_i32_0 = arith.constant 0 : i32
    return %c0_i32, %arg1 : i32, i32
  }
  func.func @transform_4(%arg0: i32, %arg1: i32) -> (i32, i32) {
    %c0_i32 = arith.constant 0 : i32
    %c0_i32_0 = arith.constant 0 : i32
    %c0_i32_1 = arith.constant 0 : i32
    return %c0_i32, %c0_i32_0 : i32, i32
  }
  func.func @transform_5(%arg0: i32, %arg1: i32) -> (i32, i32) {
    %c0_i32 = arith.constant 0 : i32
    %c0_i32_0 = arith.constant 0 : i32
    %c0_i32_1 = arith.constant 0 : i32
    return %c0_i32, %c0_i32_0 : i32, i32
  }
  func.func @transform_6(%arg0: i32, %arg1: i32) -> (i32, i32) {
    %c0_i32 = arith.constant 0 : i32
    %c0_i32_0 = arith.constant 0 : i32
    %c0_i32_1 = arith.constant 0 : i32
    return %c0_i32, %c0_i32_0 : i32, i32
  }
  func.func @transform_7(%arg0: i32, %arg1: i32) -> (i32, i32, i32) {
    %c0_i32 = arith.constant 0 : i32
    %c0_i32_0 = arith.constant 0 : i32
    return %arg0, %c0_i32, %arg1 : i32, i32, i32
  }
}

</mosaic_0001>

<llo_original>
// kernel: tpu_custom_call.1
$region0: #{tpu_custom_call.1}
  #allocation0 [shape = 'u32[]', space=smem, size = 0x4, offset = 0x4, fixed_abs, tag = 'smem constant byte address 0x4 - core index']
  #allocation1 [shape = 'u32[144,128]{1,0:T(1,128)}', space=vmem, size = 0x12000, scoped, tag = 'internal scratch']
  %s0 = inlined_call_operand.hbm [shape: f32[2,16,256], index: 0, kind: input, shape index: {}]
  %s1 = inlined_call_operand.hbm [shape: f32[2,16,256], index: 1, kind: input, shape index: {}]
  %s2 = inlined_call_operand.hbm [shape: f32[16,256], index: 2, kind: input, shape index: {}]
  %s3 = inlined_call_operand.hbm [shape: f32[16,256], index: 3, kind: input, shape index: {}]
  %s4 = inlined_call_operand.hbm [shape: f32[16,16], index: 4, kind: input, shape index: {}]
  %s5 = inlined_call_operand.hbm [shape: f32[8,16], index: 5, kind: input, shape index: {}]
  %s6 = inlined_call_operand.hbm [shape: f32[16,8], index: 6, kind: input, shape index: {}]
  %s7 = inlined_call_operand.hbm [shape: f32[2,16,256], index: 7, kind: output, shape index: {}]
  %s8 = sld [smem:[#allocation0]]
  $region89: #{tpu_custom_call.1} parent=0
    _
  %s10 = ssub.s32 1, %s8
  %s11 = scalar_select 0, %s10, %s8
  $region1: #{tpu_custom_call.1} parent=0
    #allocation2 [shape = 'u8[32768]{0}', space=vmem, size = 0x8000, scoped, tag = 'input window, operand 0']
    #allocation3 [shape = 's32[2]{0}', space=sflag, size = 0x8, scoped, tag = 'scoped memory for tpu_custom_call.1']
    #allocation4 [shape = 's32[2]{0}', space=sflag, size = 0x8, scoped, tag = 'scoped memory for tpu_custom_call.1']
    #allocation5 [shape = 'u8[16384]{0}', space=vmem, size = 0x4000, scoped, tag = 'input window, operand 1']
    #allocation6 [shape = 's32[2]{0}', space=sflag, size = 0x8, scoped, tag = 'scoped memory for tpu_custom_call.1']
    #allocation7 [shape = 'u8[16384]{0}', space=vmem, size = 0x4000, scoped, tag = 'input window, operand 2, single buffered']
    #allocation8 [shape = 'u8[16384]{0}', space=vmem, size = 0x4000, scoped, tag = 'input window, operand 3']
    #allocation9 [shape = 's32[2]{0}', space=sflag, size = 0x8, scoped, tag = 'scoped memory for tpu_custom_call.1']
    #allocation10 [shape = 'u8[8192]{0}', space=vmem, size = 0x2000, scoped, tag = 'input window, operand 4, single buffered']
    #allocation11 [shape = 'u8[4096]{0}', space=vmem, size = 0x1000, scoped, tag = 'input window, operand 5, single buffered']
    #allocation12 [shape = 's32[1]{0}', space=sflag, size = 0x4, scoped, tag = 'scoped memory for tpu_custom_call.1']
    #allocation13 [shape = 'u8[8192]{0}', space=vmem, size = 0x2000, scoped, tag = 'input window, operand 6, single buffered']
    #allocation14 [shape = 'u8[16384]{0}', space=vmem, size = 0x4000, scoped, tag = 'output window, operand 0']
    %12 = vsyncpa [#allocation3], 0
    %s13 = scalar_lea.sflag [#allocation3], 1
    %14 = vsyncpa %s13, 0
    %15 = vsyncpa [#allocation6], 0
    %s16 = scalar_lea.sflag [#allocation6], 1
    %17 = vsyncpa %s16, 0
    %18 = vsyncpa [#allocation9], 0
    %s19 = scalar_lea.sflag [#allocation9], 1
    %20 = vsyncpa %s19, 0
    %21 = vsyncpa [#allocation12], 0
    %22 = vsyncpa [#allocation4], 0
    %s23 = scalar_lea.sflag [#allocation4], 1
    %24 = vsyncpa %s23, 0
    loop: start=0, step=1, limit=6
    $region2: #{tpu_custom_call.1} parent=1 // loop_pre_header
      _
    $region3: #{tpu_custom_call.1} parent=1 // loop_header
      %s26 = sphi 0, %s30
      %p27 = scmp.ge.s32.totalorder %s26, 6
      %s33 = sphi 0, %s45
      %s34 = sphi 0, %s41
      %s35 = sphi 0, %s33
      %s36 = sphi 0, %s34
      %s37 = sphi 0, %s35
      %s38 = sphi 0, %s36
      %s48 = sphi 0, %s50
      %s51 = sphi 0, %s48
      %s52 = sphi 0, %s51
      %s68 = sphi 0, %s52
      %s76 = sphi 0, %s78
      %s79 = sphi 0, %s76
      %s80 = sphi 0, %s79
      %s96 = sphi 0, %s80
      %s100 = sphi 0, %s100
      %s102 = sphi 0, %s100
      %s103 = sphi 0, %s102
      %s117 = sphi 0, %s103
      %s123 = sphi 0, %s125
      %s126 = sphi 0, %s123
      %s127 = sphi 0, %s126
      %s143 = sphi 0, %s127
      %s147 = sphi 0, %s147
      %s149 = sphi 0, %s147
      %s150 = sphi 0, %s149
      %s164 = sphi 0, %s150
      %s168 = sphi 0, %s168
      %s170 = sphi 0, %s168
      %s171 = sphi 0, %s170
      %s185 = sphi 0, %s171
      %s189 = sphi 0, %s189
      %s191 = sphi 0, %s189
      %s192 = sphi 0, %s191
      %s206 = sphi 0, %s192
      %s214 = sphi 0, %s216
      %s217 = sphi 0, %s214
      %s218 = sphi 0, %s217
      %s234 = sphi 0, %s218
    $region4: #{tpu_custom_call.1} parent=1 // loop_header_branch
      %29 = sbr.rel (%p27) target = $region8
    $region5: #{tpu_custom_call.1} parent=1 // loop_body
      %s31 = ssub.s32 %s26, 1
      %s32 = ssub.s32 %s26, 2
      %s39 = sadd.s32 1, %s34
      %p40 = scmp.ge.s32.totalorder %s39, 2
      %s41 = scalar_select %p40, 0, %s39
      %s42 = sadd.s32 1, %s33
      %s43 = scalar_select %p40, %s42, %s33
      %p44 = scmp.ge.s32.totalorder %s43, 2
      %s45 = scalar_select %p44, 0, %s43
      %s46 = ssub.s32 %s33, %s45
      %p47 = scmp.eq.s32.totalorder %s46, 0
      %s49 = sadd.s32 %s48, 1
      %s50 = scalar_select %p47, %s48, %s49
      %p53 = pneg %p47
      %p54 = scmp.eq.s32.totalorder %s26, 3
      %p55 = por %p53, %p54
      %p56 = scmp.ne.s32.totalorder %s48, %s51
      %p57 = scmp.eq.s32.totalorder %s26, 0
      %p58 = por %p56, %p57
      %p59 = scmp.ne.s32.totalorder %s48, %s51
      %p60 = scmp.eq.s32.totalorder %s31, 3
      %p61 = por %p59, %p60
      %p62 = scmp.ne.s32.totalorder %s51, %s52
      %p63 = scmp.eq.s32.totalorder %s31, 0
      %p64 = por %p62, %p63
      %p65 = scmp.ne.s32.totalorder %s51, %s52
      %p66 = scmp.eq.s32.totalorder %s32, 3
      %p67 = por %p65, %p66
      %p69 = scmp.ne.s32.totalorder %s52, %s68
      %p70 = scmp.eq.s32.totalorder %s32, 0
      %p71 = por %p69, %p70
      %s72 = ssub.s32 %s33, %s45
      %s73 = ssub.s32 %s34, %s41
      %s74 = sor.u32 %s72, %s73
      %p75 = scmp.eq.s32.totalorder %s74, 0
      %s77 = sadd.s32 %s76, 1
      %s78 = scalar_select %p75, %s76, %s77
      %p81 = pneg %p75
      %p82 = scmp.eq.s32.totalorder %s26, 3
      %p83 = por %p81, %p82
      %p84 = scmp.ne.s32.totalorder %s76, %s79
      %p85 = scmp.eq.s32.totalorder %s26, 0
      %p86 = por %p84, %p85
      %p87 = scmp.ne.s32.totalorder %s76, %s79
      %p88 = scmp.eq.s32.totalorder %s31, 3
      %p89 = por %p87, %p88
      %p90 = scmp.ne.s32.totalorder %s79, %s80
      %p91 = scmp.eq.s32.totalorder %s31, 0
      %p92 = por %p90, %p91
      %p93 = scmp.ne.s32.totalorder %s79, %s80
      %p94 = scmp.eq.s32.totalorder %s32, 3
      %p95 = por %p93, %p94
      %p97 = scmp.ne.s32.totalorder %s80, %s96
      %p98 = scmp.eq.s32.totalorder %s32, 0
      %p99 = por %p97, %p98
      %s101 = sadd.s32 %s100, 1
      %p104 = scmp.eq.s32.totalorder %s26, 3
      %p105 = scmp.ne.s32.totalorder %s100, %s102
      %p106 = scmp.eq.s32.totalorder %s26, 0
      %p107 = por %p105, %p106
      %p108 = scmp.ne.s32.totalorder %s100, %s102
      %p109 = scmp.eq.s32.totalorder %s31, 3
      %p110 = por %p108, %p109
      %p111 = scmp.ne.s32.totalorder %s102, %s103
      %p112 = scmp.eq.s32.totalorder %s31, 0
      %p113 = por %p111, %p112
      %p114 = scmp.ne.s32.totalorder %s102, %s103
      %p115 = scmp.eq.s32.totalorder %s32, 3
      %p116 = por %p114, %p115
      %p118 = scmp.ne.s32.totalorder %s103, %s117
      %p119 = scmp.eq.s32.totalorder %s32, 0
      %p120 = por %p118, %p119
      %s121 = ssub.s32 %s34, %s41
      %p122 = scmp.eq.s32.totalorder %s121, 0
      %s124 = sadd.s32 %s123, 1
      %s125 = scalar_select %p122, %s123, %s124
      %p128 = pneg %p122
      %p129 = scmp.eq.s32.totalorder %s26, 3
      %p130 = por %p128, %p129
      %p131 = scmp.ne.s32.totalorder %s123, %s126
      %p132 = scmp.eq.s32.totalorder %s26, 0
      %p133 = por %p131, %p132
      %p134 = scmp.ne.s32.totalorder %s123, %s126
      %p135 = scmp.eq.s32.totalorder %s31, 3
      %p136 = por %p134, %p135
      %p137 = scmp.ne.s32.totalorder %s126, %s127
      %p138 = scmp.eq.s32.totalorder %s31, 0
      %p139 = por %p137, %p138
      %p140 = scmp.ne.s32.totalorder %s126, %s127
      %p141 = scmp.eq.s32.totalorder %s32, 3
      %p142 = por %p140, %p141
      %p144 = scmp.ne.s32.totalorder %s127, %s143
      %p145 = scmp.eq.s32.totalorder %s32, 0
      %p146 = por %p144, %p145
      %s148 = sadd.s32 %s147, 1
      %p151 = scmp.eq.s32.totalorder %s26, 3
      %p152 = scmp.ne.s32.totalorder %s147, %s149
      %p153 = scmp.eq.s32.totalorder %s26, 0
      %p154 = por %p152, %p153
      %p155 = scmp.ne.s32.totalorder %s147, %s149
      %p156 = scmp.eq.s32.totalorder %s31, 3
      %p157 = por %p155, %p156
      %p158 = scmp.ne.s32.totalorder %s149, %s150
      %p159 = scmp.eq.s32.totalorder %s31, 0
      %p160 = por %p158, %p159
      %p161 = scmp.ne.s32.totalorder %s149, %s150
      %p162 = scmp.eq.s32.totalorder %s32, 3
      %p163 = por %p161, %p162
      %p165 = scmp.ne.s32.totalorder %s150, %s164
      %p166 = scmp.eq.s32.totalorder %s32, 0
      %p167 = por %p165, %p166
      %s169 = sadd.s32 %s168, 1
      %p172 = scmp.eq.s32.totalorder %s26, 3
      %p173 = scmp.ne.s32.totalorder %s168, %s170
      %p174 = scmp.eq.s32.totalorder %s26, 0
      %p175 = por %p173, %p174
      %p176 = scmp.ne.s32.totalorder %s168, %s170
      %p177 = scmp.eq.s32.totalorder %s31, 3
      %p178 = por %p176, %p177
      %p179 = scmp.ne.s32.totalorder %s170, %s171
      %p180 = scmp.eq.s32.totalorder %s31, 0
      %p181 = por %p179, %p180
      %p182 = scmp.ne.s32.totalorder %s170, %s171
      %p183 = scmp.eq.s32.totalorder %s32, 3
      %p184 = por %p182, %p183
      %p186 = scmp.ne.s32.totalorder %s171, %s185
      %p187 = scmp.eq.s32.totalorder %s32, 0
      %p188 = por %p186, %p187
      %s190 = sadd.s32 %s189, 1
      %p193 = scmp.eq.s32.totalorder %s26, 3
      %p194 = scmp.ne.s32.totalorder %s189, %s191
      %p195 = scmp.eq.s32.totalorder %s26, 0
      %p196 = por %p194, %p195
      %p197 = scmp.ne.s32.totalorder %s189, %s191
      %p198 = scmp.eq.s32.totalorder %s31, 3
      %p199 = por %p197, %p198
      %p200 = scmp.ne.s32.totalorder %s191, %s192
      %p201 = scmp.eq.s32.totalorder %s31, 0
      %p202 = por %p200, %p201
      %p203 = scmp.ne.s32.totalorder %s191, %s192
      %p204 = scmp.eq.s32.totalorder %s32, 3
      %p205 = por %p203, %p204
      %p207 = scmp.ne.s32.totalorder %s192, %s206
      %p208 = scmp.eq.s32.totalorder %s32, 0
      %p209 = por %p207, %p208
      %s210 = ssub.s32 %s33, %s45
      %s211 = ssub.s32 %s34, %s41
      %s212 = sor.u32 %s210, %s211
      %p213 = scmp.eq.s32.totalorder %s212, 0
      %s215 = sadd.s32 %s214, 1
      %s216 = scalar_select %p213, %s214, %s215
      %p219 = pneg %p213
      %p220 = scmp.eq.s32.totalorder %s26, 3
      %p221 = por %p219, %p220
      %p222 = scmp.ne.s32.totalorder %s214, %s217
      %p223 = scmp.eq.s32.totalorder %s26, 0
      %p224 = por %p222, %p223
      %p225 = scmp.ne.s32.totalorder %s214, %s217
      %p226 = scmp.eq.s32.totalorder %s31, 3
      %p227 = por %p225, %p226
      %p228 = scmp.ne.s32.totalorder %s217, %s218
      %p229 = scmp.eq.s32.totalorder %s31, 0
      %p230 = por %p228, %p229
      %p231 = scmp.ne.s32.totalorder %s217, %s218
      %p232 = scmp.eq.s32.totalorder %s32, 3
      %p233 = por %p231, %p232
      %p235 = scmp.ne.s32.totalorder %s218, %s234
      %p236 = scmp.eq.s32.totalorder %s32, 0
      %p237 = por %p235, %p236
      %p238 = scmp.le.s32.totalorder 1, %s26
      %p239 = scmp.lt.s32.totalorder %s26, 5
      %p240 = pnand %p238, %p239
      %p241 = pneg %p240
      // Predicated region
      $region9: #{tpu_custom_call.1} parent=5 // pred_check
        _
      $region10: #{tpu_custom_call.1} parent=5 // pred_check_branch
        %243 = sbr.rel (%p240) target = $region12
      $region11: #{tpu_custom_call.1} parent=5 // pred_region
        %s244 = ssub.s32 %s26, 1
        // Predicated region
        $region13: #{tpu_custom_call.1} parent=11 // pred_check
          %p245 = pneg %p113
        $region14: #{tpu_custom_call.1} parent=11 // pred_check_branch
          %247 = sbr.rel (%p245) target = $region16
        $region15: #{tpu_custom_call.1} parent=11 // pred_region
          %s249 = ssub.s32 512, 512
          %250 = vsyncadd [#allocation6], %s249
          %s251 = sshll.u32 [#allocation7], 4
          %s252 = int_to_ptr.vmem [resolvable:$true] %s251
          %257 = dma.hbm_to_vmem [thread:$0]  %s2, 512, %s252, [#allocation6], 256, 256, 16
        $region16: #{tpu_custom_call.1} parent=11 // pred_fallthru
          _
        // Predicated region
        $region17: #{tpu_custom_call.1} parent=11 // pred_check
          %p258 = pneg %p160
        $region18: #{tpu_custom_call.1} parent=11 // pred_check_branch
          %260 = sbr.rel (%p258) target = $region20
        $region19: #{tpu_custom_call.1} parent=11 // pred_region
          %s262 = ssub.s32 256, 256
          %263 = vsyncadd [#allocation9], %s262
          %s264 = sshll.u32 [#allocation10], 4
          %s265 = int_to_ptr.vmem [resolvable:$true] %s264
          %270 = dma.hbm_to_vmem [thread:$0]  %s4, 256, %s265, [#allocation9], 128, 128, 8
        $region20: #{tpu_custom_call.1} parent=11 // pred_fallthru
          _
        // Predicated region
        $region21: #{tpu_custom_call.1} parent=11 // pred_check
          %p271 = pneg %p181
        $region22: #{tpu_custom_call.1} parent=11 // pred_check_branch
          %273 = sbr.rel (%p271) target = $region24
        $region23: #{tpu_custom_call.1} parent=11 // pred_region
          %s275 = ssub.s32 128, 128
          %276 = vsyncadd [#allocation12], %s275
          %s278 = sshll.u32 [#allocation11], 4
          %s279 = int_to_ptr.vmem [resolvable:$true] %s278
          %281 = dma.hbm_to_vmem [thread:$0]  %s5, 128, %s279, [#allocation12]
        $region24: #{tpu_custom_call.1} parent=11 // pred_fallthru
          _
        // Predicated region
        $region25: #{tpu_custom_call.1} parent=11 // pred_check
          %p282 = pneg %p202
        $region26: #{tpu_custom_call.1} parent=11 // pred_check_branch
          %284 = sbr.rel (%p282) target = $region28
        $region27: #{tpu_custom_call.1} parent=11 // pred_region
          %s286 = ssub.s32 256, 256
          %287 = vsyncadd [#allocation12], %s286
          %s288 = sshll.u32 [#allocation13], 4
          %s289 = int_to_ptr.vmem [resolvable:$true] %s288
          %294 = dma.hbm_to_vmem [thread:$0]  %s6, 256, %s289, [#allocation12], 128, 128, 8
        $region28: #{tpu_custom_call.1} parent=11 // pred_fallthru
          _
      $region12: #{tpu_custom_call.1} parent=5 // pred_fallthru
        _
      %p295 = scmp.lt.s32.totalorder %s26, 4
      // Predicated region
      $region29: #{tpu_custom_call.1} parent=5 // pred_check
        %p296 = pneg %p295
      $region30: #{tpu_custom_call.1} parent=5 // pred_check_branch
        %298 = sbr.rel (%p296) target = $region32
      $region31: #{tpu_custom_call.1} parent=5 // pred_region
        // Predicated region
        $region33: #{tpu_custom_call.1} parent=31 // pred_check
          %p299 = pneg %p58
        $region34: #{tpu_custom_call.1} parent=31 // pred_check_branch
          %301 = sbr.rel (%p299) target = $region36
        $region35: #{tpu_custom_call.1} parent=31 // pred_region
          %s302 = sand.u32 %s48, 1
          %s303 = scalar_lea.sflag [#allocation3], %s302
          %s304 = sand.u32 %s48, 1
          %s305 = smul.addr %s304, 32
          %s306 = scalar_lea.vmem [#allocation2], %s305
          %s308 = ssub.s32 512, 512
          %309 = vsyncadd %s303, %s308
          %s310 = smul.addr %s33, 4
          %s311 = smul.addr %s310, 128
          %s312 = scalar_lea.hbm %s0, %s311
          %s313 = sshll.u32 %s306, 4
          %s314 = int_to_ptr.vmem [resolvable:$true] %s313
          %319 = dma.hbm_to_vmem [thread:$0]  %s312, 512, %s314, %s303, 256, 256, 16
        $region36: #{tpu_custom_call.1} parent=31 // pred_fallthru
          _
        // Predicated region
        $region37: #{tpu_custom_call.1} parent=31 // pred_check
          %p320 = pneg %p86
        $region38: #{tpu_custom_call.1} parent=31 // pred_check_branch
          %322 = sbr.rel (%p320) target = $region40
        $region39: #{tpu_custom_call.1} parent=31 // pred_region
          %s323 = sand.u32 %s26, 1
          %s324 = scalar_lea.sflag [#allocation6], %s323
          %s325 = sand.u32 %s76, 1
          %s326 = smul.addr %s325, 16
          %s327 = scalar_lea.vmem [#allocation5], %s326
          %s329 = ssub.s32 256, 256
          %330 = vsyncadd %s324, %s329
          %s331 = smul.addr %s33, 4
          %s332 = sadd.s32 %s34, %s331
          %s333 = smul.addr %s332, 128
          %s334 = scalar_lea.hbm %s1, %s333
          %s335 = sshll.u32 %s327, 4
          %s336 = int_to_ptr.vmem [resolvable:$true] %s335
          %341 = dma.hbm_to_vmem [thread:$0]  %s334, 256, %s336, %s324, 256, 128, 8
        $region40: #{tpu_custom_call.1} parent=31 // pred_fallthru
          _
        // Predicated region
        $region41: #{tpu_custom_call.1} parent=31 // pred_check
          %p342 = pneg %p133
        $region42: #{tpu_custom_call.1} parent=31 // pred_check_branch
          %344 = sbr.rel (%p342) target = $region44
        $region43: #{tpu_custom_call.1} parent=31 // pred_region
          %s345 = sand.u32 %s26, 1
          %s346 = scalar_lea.sflag [#allocation9], %s345
          %s347 = sand.u32 %s123, 1
          %s348 = smul.addr %s347, 16
          %s349 = scalar_lea.vmem [#allocation8], %s348
          %s351 = ssub.s32 256, 256
          %352 = vsyncadd %s346, %s351
          %s353 = smul.addr %s34, 128
          %s354 = scalar_lea.hbm %s3, %s353
          %s355 = sshll.u32 %s349, 4
          %s356 = int_to_ptr.vmem [resolvable:$true] %s355
          %361 = dma.hbm_to_vmem [thread:$0]  %s354, 256, %s356, %s346, 256, 128, 8
        $region44: #{tpu_custom_call.1} parent=31 // pred_fallthru
          _
      $region32: #{tpu_custom_call.1} parent=5 // pred_fallthru
        _
      %p362 = scmp.le.s32.totalorder 1, %s26
      %p363 = scmp.lt.s32.totalorder %s26, 5
      %p364 = pnand %p362, %p363
      %p365 = pneg %p364
      // Predicated region
      $region45: #{tpu_custom_call.1} parent=5 // pred_check
        _
      $region46: #{tpu_custom_call.1} parent=5 // pred_check_branch
        %367 = sbr.rel (%p364) target = $region48
      $region47: #{tpu_custom_call.1} parent=5 // pred_region
        %s368 = ssub.s32 %s26, 1
        %s369 = sand.u32 %s51, 1
        %s370 = scalar_lea.sflag [#allocation3], %s369
        %s371 = sand.u32 %s51, 1
        %s372 = smul.addr %s371, 32
        %s373 = scalar_lea.vmem [#allocation2], %s372
        // Predicated region
        $region49: #{tpu_custom_call.1} parent=47 // pred_check
          %p374 = pneg %p64
        $region50: #{tpu_custom_call.1} parent=47 // pred_check_branch
          %376 = sbr.rel (%p374) target = $region52
        $region51: #{tpu_custom_call.1} parent=47 // pred_region
          %377 = dma.done %s370, 512
        $region52: #{tpu_custom_call.1} parent=47 // pred_fallthru
          _
        %s378 = sand.u32 %s31, 1
        %s379 = scalar_lea.sflag [#allocation6], %s378
        %s380 = sand.u32 %s79, 1
        %s381 = smul.addr %s380, 16
        %s382 = scalar_lea.vmem [#allocation5], %s381
        // Predicated region
        $region53: #{tpu_custom_call.1} parent=47 // pred_check
          %p383 = pneg %p92
        $region54: #{tpu_custom_call.1} parent=47 // pred_check_branch
          %385 = sbr.rel (%p383) target = $region56
        $region55: #{tpu_custom_call.1} parent=47 // pred_region
          %386 = dma.done %s379, 256
        $region56: #{tpu_custom_call.1} parent=47 // pred_fallthru
          _
        // Predicated region
        $region57: #{tpu_custom_call.1} parent=47 // pred_check
          %p387 = pneg %p113
        $region58: #{tpu_custom_call.1} parent=47 // pred_check_branch
          %389 = sbr.rel (%p387) target = $region60
        $region59: #{tpu_custom_call.1} parent=47 // pred_region
          %390 = dma.done [#allocation6], 512
        $region60: #{tpu_custom_call.1} parent=47 // pred_fallthru
          _
        %s391 = sand.u32 %s31, 1
        %s392 = scalar_lea.sflag [#allocation9], %s391
        %s393 = sand.u32 %s126, 1
        %s394 = smul.addr %s393, 16
        %s395 = scalar_lea.vmem [#allocation8], %s394
        // Predicated region
        $region61: #{tpu_custom_call.1} parent=47 // pred_check
          %p396 = pneg %p139
        $region62: #{tpu_custom_call.1} parent=47 // pred_check_branch
          %398 = sbr.rel (%p396) target = $region64
        $region63: #{tpu_custom_call.1} parent=47 // pred_region
          %399 = dma.done %s392, 256
        $region64: #{tpu_custom_call.1} parent=47 // pred_fallthru
          _
        // Predicated region
        $region65: #{tpu_custom_call.1} parent=47 // pred_check
          %p400 = pneg %p160
        $region66: #{tpu_custom_call.1} parent=47 // pred_check_branch
          %402 = sbr.rel (%p400) target = $region68
        $region67: #{tpu_custom_call.1} parent=47 // pred_region
          %403 = dma.done [#allocation9], 256
        $region68: #{tpu_custom_call.1} parent=47 // pred_fallthru
          _
        // Predicated region
        $region69: #{tpu_custom_call.1} parent=47 // pred_check
          %p404 = pneg %p181
        $region70: #{tpu_custom_call.1} parent=47 // pred_check_branch
          %406 = sbr.rel (%p404) target = $region72
        $region71: #{tpu_custom_call.1} parent=47 // pred_region
          %407 = dma.done [#allocation12], 128
        $region72: #{tpu_custom_call.1} parent=47 // pred_fallthru
          _
        // Predicated region
        $region73: #{tpu_custom_call.1} parent=47 // pred_check
          %p408 = pneg %p202
        $region74: #{tpu_custom_call.1} parent=47 // pred_check_branch
          %410 = sbr.rel (%p408) target = $region76
        $region75: #{tpu_custom_call.1} parent=47 // pred_region
          %411 = dma.done [#allocation12], 256
        $region76: #{tpu_custom_call.1} parent=47 // pred_fallthru
          _
        %s412 = sand.u32 %s51, 1
        %s413 = scalar_lea.sflag [#allocation3], %s412
        %s414 = sand.u32 %s51, 1
        %s415 = smul.addr %s414, 32
        %s416 = scalar_lea.vmem [#allocation2], %s415
        %p417 = pneg %p64
        %p418 = pneg %p61
        %s419 = sand.u32 %s31, 1
        %s420 = scalar_lea.sflag [#allocation6], %s419
        %s421 = sand.u32 %s79, 1
        %s422 = smul.addr %s421, 16
        %s423 = scalar_lea.vmem [#allocation5], %s422
        %p424 = pneg %p92
        %p425 = pneg %p89
        %p426 = pneg %p113
        %p427 = pneg %p110
        %s428 = sand.u32 %s31, 1
        %s429 = scalar_lea.sflag [#allocation9], %s428
        %s430 = sand.u32 %s126, 1
        %s431 = smul.addr %s430, 16
        %s432 = scalar_lea.vmem [#allocation8], %s431
        %p433 = pneg %p139
        %p434 = pneg %p136
        %p435 = pneg %p160
        %p436 = pneg %p157
        %p437 = pneg %p181
        %p438 = pneg %p178
        %p439 = pneg %p202
        %p440 = pneg %p199
        %p441 = pneg %p230
        %p442 = pneg %p227
        %s443 = sand.u32 %s217, 1
        %s444 = scalar_lea.sflag [#allocation4], %s443
        %s445 = sand.u32 %s217, 1
        %s446 = smul.addr %s445, 16
        %s447 = scalar_lea.vmem [#allocation14], %s446
        %v449 = vld [vmem:[%s373] sm:$0xff]
        %v450 = vld [vmem:[%s373 + $0x8] sm:$0xff]
        %v451 = vld [vmem:[%s373 + $0x10] sm:$0xff]
        %v452 = vld [vmem:[%s373 + $0x18] sm:$0xff]
        %v453 = vld [vmem:[#allocation7] sm:$0xff]
        %v454 = vld [vmem:[#allocation7 + $0x8] sm:$0xff]
        %v455 = vld [vmem:[#allocation7 + $0x10] sm:$0xff]
        %v456 = vld [vmem:[#allocation7 + $0x18] sm:$0xff]
        %v457 = vadd.f32 %v449, %v453
        %v458 = vadd.f32 %v450, %v454
        %v459 = vadd.f32 %v451, %v455
        %v460 = vadd.f32 %v452, %v456
        %v461 = vld [vmem:[#allocation10] sm:$0xff]
        %v462 = vld [vmem:[#allocation10 + $0x8] sm:$0xff]
        %v463 = vpack.c.bf16 %v462, %v461
        %v464 = vpack.c.bf16 %v459, %v457
        %v465 = vpack.c.bf16 %v460, %v458
        %vm466 = vcmask 130048
        %v468 = vsel %vm466, %v463, 0
        %470 = vmatprep.subr.bf16.mxu0 %v465
        %471 = vmatpush1.bf16.msra.mxu0 %v464
        %472 = vmatprep.subr.bf16.mxu0 0
        %473 = vmatpush1.bf16.msra.mxu0 0
        %474 = vmatprep.subr.bf16.mxu0 0
        %475 = vmatpush1.bf16.msra.mxu0 0
        %476 = vmatprep.subr.bf16.mxu0 0
        %477 = vmatpush1.bf16.msra.mxu0 0
        %478 = vmatprep.subr.bf16.mxu0 0
        %479 = vmatpush1.bf16.msra.mxu0 0
        %480 = vmatprep.subr.bf16.mxu0 0
        %481 = vmatpush1.bf16.msra.mxu0 0
        %482 = vmatprep.subr.bf16.mxu0 0
        %483 = vmatpush1.bf16.msra.mxu0 0
        %484 = vmatprep.subr.bf16.mxu0 0
        %485 = vmatpush1.bf16.msra.mxu0 0
        %486 = vmatprep.subr.bf16.mxu0 0
        %487 = vmatpush1.bf16.msra.mxu0 0
        %488 = vmatprep.subr.bf16.mxu0 0
        %489 = vmatpush1.bf16.msra.mxu0 0
        %490 = vmatprep.subr.bf16.mxu0 0
        %491 = vmatpush1.bf16.msra.mxu0 0
        %492 = vmatprep.subr.bf16.mxu0 0
        %493 = vmatpush1.bf16.msra.mxu0 0
        %494 = vmatprep.subr.bf16.mxu0 0
        %495 = vmatpush1.bf16.msra.mxu0 0
        %496 = vmatprep.subr.bf16.mxu0 0
        %497 = vmatpush1.bf16.msra.mxu0 0
        %498 = vmatprep.subr.bf16.mxu0 0
        %499 = vmatpush1.bf16.msra.mxu0 0
        %500 = vmatprep.subr.bf16.mxu0 0
        %501 = vmatpush1.bf16.msra.mxu0 0
        %502 = vmatprep.mubr.bf16.mxu0 0
        %503 = vmatmul.mubr.bf16.gmra.mrb[0].mxu0 %v468
        %v504 = vpop.f32.mrb[0].mxu0
        %v505 = vadd.f32 0.0, %v504
        %v506 = vpop.f32.mrb[0].mxu0
        %v507 = vadd.f32 0.0, %v506
        %v508 = vpop.f32.mrb[0].mxu0
        %v509 = vadd.f32 0.0, %v508
        %v510 = vpop.f32.mrb[0].mxu0
        %v511 = vadd.f32 0.0, %v510
        %512 = vdwg.mxu0
        %v513 = vpack.c.bf16 %v505, %v505
        %v514 = vpack.c.bf16 %v507, %v507
        %v515 = vpack.c.bf16 %v509, %v509
        %v516 = vpack.c.bf16 %v511, %v511
        %v517 = vld [vmem:[%s382] sm:$0xff]
        %v518 = vld [vmem:[%s382 + $0x8] sm:$0xff]
        %v519 = vld [vmem:[%s395] sm:$0xff]
        %v520 = vld [vmem:[%s395 + $0x8] sm:$0xff]
        %v521 = vadd.f32 %v517, %v519
        %v522 = vadd.f32 %v518, %v520
        %v523 = vld [vmem:[#allocation11] sm:$0xff]
        %v524 = vpack.c.bf16 %v523, %v523
        %v525 = vpack.c.bf16 %v522, %v521
        %v527 = vsel %vm466, %v524, 0
        %529 = vmatprep.subr.bf16.mxu0 0
        %530 = vmatpush1.bf16.msra.mxu0 %v525
        %531 = vmatprep.subr.bf16.mxu0 0
        %532 = vmatpush1.bf16.msra.mxu0 0
        %533 = vmatprep.subr.bf16.mxu0 0
        %534 = vmatpush1.bf16.msra.mxu0 0
        %535 = vmatprep.subr.bf16.mxu0 0
        %536 = vmatpush1.bf16.msra.mxu0 0
        %537 = vmatprep.subr.bf16.mxu0 0
        %538 = vmatpush1.bf16.msra.mxu0 0
        %539 = vmatprep.subr.bf16.mxu0 0
        %540 = vmatpush1.bf16.msra.mxu0 0
        %541 = vmatprep.subr.bf16.mxu0 0
        %542 = vmatpush1.bf16.msra.mxu0 0
        %543 = vmatprep.subr.bf16.mxu0 0
        %544 = vmatpush1.bf16.msra.mxu0 0
        %545 = vmatprep.subr.bf16.mxu0 0
        %546 = vmatpush1.bf16.msra.mxu0 0
        %547 = vmatprep.subr.bf16.mxu0 0
        %548 = vmatpush1.bf16.msra.mxu0 0
        %549 = vmatprep.subr.bf16.mxu0 0
        %550 = vmatpush1.bf16.msra.mxu0 0
        %551 = vmatprep.subr.bf16.mxu0 0
        %552 = vmatpush1.bf16.msra.mxu0 0
        %553 = vmatprep.subr.bf16.mxu0 0
        %554 = vmatpush1.bf16.msra.mxu0 0
        %555 = vmatprep.subr.bf16.mxu0 0
        %556 = vmatpush1.bf16.msra.mxu0 0
        %557 = vmatprep.subr.bf16.mxu0 0
        %558 = vmatpush1.bf16.msra.mxu0 0
        %559 = vmatprep.subr.bf16.mxu0 0
        %560 = vmatpush1.bf16.msra.mxu0 0
        %561 = vmatprep.mubr.bf16.mxu0 0
        %562 = vmatmul.mubr.bf16.gmra.mrb[0].mxu0 %v527
        %v563 = vpop.f32.mrb[0].mxu0
        %v564 = vadd.f32 0.0, %v563
        %v565 = vpop.f32.mrb[0].mxu0
        %v566 = vpop.f32.mrb[0].mxu0
        %v567 = vpop.f32.mrb[0].mxu0
        %568 = vdwg.mxu0
        %v569 = vpack.c.bf16 %v564, %v564
        %570 = vxpose.xlu0.c.b16.start [1/8] %v569, 128
        %571 = vxpose.xlu0.c.b16.cont [2/8] 0, 128
        %572 = vxpose.xlu0.c.b16.cont [3/8] 0, 128
        %573 = vxpose.xlu0.c.b16.cont [4/8] 0, 128
        %574 = vxpose.xlu0.c.b16.cont [5/8] 0, 128
        %575 = vxpose.xlu0.c.b16.cont [6/8] 0, 128
        %576 = vxpose.xlu0.c.b16.cont [7/8] 0, 128
        %577 = vxpose.xlu0.c.b16.end [8/8] 0, 128
        %v578 = vpop.trf.xlu0
        %v579 = vpop.trf.xlu0
        %v580 = vpop.trf.xlu0
        %v581 = vpop.trf.xlu0
        %v582 = vpop.trf.xlu0
        %v583 = vpop.trf.xlu0
        %v584 = vpop.trf.xlu0
        %v585 = vpop.trf.xlu0
        %vm586 = vcmask 64512
        %v588 = vsel %vm586, %v578, 0
        %v591 = vsel %vm586, %v579, 0
        %v594 = vsel %vm586, %v580, 0
        %v597 = vsel %vm586, %v581, 0
        %v600 = vsel %vm586, %v582, 0
        %v603 = vsel %vm586, %v583, 0
        %v606 = vsel %vm586, %v584, 0
        %v609 = vsel %vm586, %v585, 0
        %vm611 = vcmask 1043456
        %v613 = vsel %vm611, %v513, 0
        %v616 = vsel %vm611, %v514, 0
        %618 = vmatprep.subr.bf16.mxu0 %v616
        %619 = vmatpush1.bf16.msra.mxu0 %v613
        %620 = vmatprep.subr.bf16.mxu0 0
        %621 = vmatpush1.bf16.msra.mxu0 0
        %622 = vmatprep.subr.bf16.mxu0 0
        %623 = vmatpush1.bf16.msra.mxu0 0
        %624 = vmatprep.subr.bf16.mxu0 0
        %625 = vmatpush1.bf16.msra.mxu0 0
        %626 = vmatprep.subr.bf16.mxu0 0
        %627 = vmatpush1.bf16.msra.mxu0 0
        %628 = vmatprep.subr.bf16.mxu0 0
        %629 = vmatpush1.bf16.msra.mxu0 0
        %630 = vmatprep.subr.bf16.mxu0 0
        %631 = vmatpush1.bf16.msra.mxu0 0
        %632 = vmatprep.subr.bf16.mxu0 0
        %633 = vmatpush1.bf16.msra.mxu0 0
        %634 = vmatprep.subr.bf16.mxu0 0
        %635 = vmatpush1.bf16.msra.mxu0 0
        %636 = vmatprep.subr.bf16.mxu0 0
        %637 = vmatpush1.bf16.msra.mxu0 0
        %638 = vmatprep.subr.bf16.mxu0 0
        %639 = vmatpush1.bf16.msra.mxu0 0
        %640 = vmatprep.subr.bf16.mxu0 0
        %641 = vmatpush1.bf16.msra.mxu0 0
        %642 = vmatprep.subr.bf16.mxu0 0
        %643 = vmatpush1.bf16.msra.mxu0 0
        %644 = vmatprep.subr.bf16.mxu0 0
        %645 = vmatpush1.bf16.msra.mxu0 0
        %646 = vmatprep.subr.bf16.mxu0 0
        %647 = vmatpush1.bf16.msra.mxu0 0
        %648 = vmatprep.subr.bf16.mxu0 0
        %649 = vmatpush1.bf16.msra.mxu0 0
        %650 = vmatprep.mubr.bf16.mxu0 0
        %651 = vmatmul.mubr.bf16.gmra.mrb[0].mxu0 %v588
        %v652 = vpop.f32.mrb[0].mxu0
        %v653 = vadd.f32 0.0, %v652
        %v654 = vpop.f32.mrb[0].mxu0
        %v655 = vadd.f32 0.0, %v654
        %v656 = vpop.f32.mrb[0].mxu0
        %v657 = vadd.f32 0.0, %v656
        %v658 = vpop.f32.mrb[0].mxu0
        %v659 = vadd.f32 0.0, %v658
        %660 = vmatprep.mubr.bf16.mxu0 0
        %661 = vmatmul.mubr.bf16.gmra.mrb[0].mxu0 %v591
        %v662 = vpop.f32.mrb[0].mxu0
        %v663 = vadd.f32 0.0, %v662
        %v664 = vpop.f32.mrb[0].mxu0
        %v665 = vadd.f32 0.0, %v664
        %v666 = vpop.f32.mrb[0].mxu0
        %v667 = vadd.f32 0.0, %v666
        %v668 = vpop.f32.mrb[0].mxu0
        %v669 = vadd.f32 0.0, %v668
        %670 = vmatprep.mubr.bf16.mxu0 0
        %671 = vmatmul.mubr.bf16.gmra.mrb[0].mxu0 %v594
        %v672 = vpop.f32.mrb[0].mxu0
        %v673 = vadd.f32 0.0, %v672
        %v674 = vpop.f32.mrb[0].mxu0
        %v675 = vadd.f32 0.0, %v674
        %v676 = vpop.f32.mrb[0].mxu0
        %v677 = vadd.f32 0.0, %v676
        %v678 = vpop.f32.mrb[0].mxu0
        %v679 = vadd.f32 0.0, %v678
        %680 = vmatprep.mubr.bf16.mxu0 0
        %681 = vmatmul.mubr.bf16.gmra.mrb[0].mxu0 %v597
        %v682 = vpop.f32.mrb[0].mxu0
        %v683 = vadd.f32 0.0, %v682
        %v684 = vpop.f32.mrb[0].mxu0
        %v685 = vadd.f32 0.0, %v684
        %v686 = vpop.f32.mrb[0].mxu0
        %v687 = vadd.f32 0.0, %v686
        %v688 = vpop.f32.mrb[0].mxu0
        %v689 = vadd.f32 0.0, %v688
        %690 = vmatprep.mubr.bf16.mxu0 0
        %691 = vmatmul.mubr.bf16.gmra.mrb[0].mxu0 %v600
        %v692 = vpop.f32.mrb[0].mxu0
        %v693 = vadd.f32 0.0, %v692
        %v694 = vpop.f32.mrb[0].mxu0
        %v695 = vadd.f32 0.0, %v694
        %v696 = vpop.f32.mrb[0].mxu0
        %v697 = vadd.f32 0.0, %v696
        %v698 = vpop.f32.mrb[0].mxu0
        %v699 = vadd.f32 0.0, %v698
        %700 = vmatprep.mubr.bf16.mxu0 0
        %701 = vmatmul.mubr.bf16.gmra.mrb[0].mxu0 %v603
        %v702 = vpop.f32.mrb[0].mxu0
        %v703 = vadd.f32 0.0, %v702
        %v704 = vpop.f32.mrb[0].mxu0
        %v705 = vadd.f32 0.0, %v704
        %v706 = vpop.f32.mrb[0].mxu0
        %v707 = vadd.f32 0.0, %v706
        %v708 = vpop.f32.mrb[0].mxu0
        %v709 = vadd.f32 0.0, %v708
        %710 = vmatprep.mubr.bf16.mxu0 0
        %711 = vmatmul.mubr.bf16.gmra.mrb[0].mxu0 %v606
        %v712 = vpop.f32.mrb[0].mxu0
        %v713 = vadd.f32 0.0, %v712
        %v714 = vpop.f32.mrb[0].mxu0
        %v715 = vadd.f32 0.0, %v714
        %v716 = vpop.f32.mrb[0].mxu0
        %v717 = vadd.f32 0.0, %v716
        %v718 = vpop.f32.mrb[0].mxu0
        %v719 = vadd.f32 0.0, %v718
        %720 = vmatprep.mubr.bf16.mxu0 0
        %721 = vmatmul.mubr.bf16.gmra.mrb[0].mxu0 %v609
        %v722 = vpop.f32.mrb[0].mxu0
        %v723 = vadd.f32 0.0, %v722
        %v724 = vpop.f32.mrb[0].mxu0
        %v725 = vadd.f32 0.0, %v724
        %v726 = vpop.f32.mrb[0].mxu0
        %v727 = vadd.f32 0.0, %v726
        %v728 = vpop.f32.mrb[0].mxu0
        %v729 = vadd.f32 0.0, %v728
        %730 = vdwg.mxu0
        %v731 = vmax.f32 %v653, %v655
        %732 = vmax.xlane.f32.xlu0 %v731
        %v733 = vpop.xlane.xlu0 %732
        %v734 = vmax.f32 %v657, %v659
        %735 = vmax.xlane.f32.xlu0 %v734
        %v736 = vpop.xlane.xlu0 %735
        %v737 = vmax.f32 %v663, %v665
        %738 = vmax.xlane.f32.xlu0 %v737
        %v739 = vpop.xlane.xlu0 %738
        %v740 = vmax.f32 %v667, %v669
        %741 = vmax.xlane.f32.xlu0 %v740
        %v742 = vpop.xlane.xlu0 %741
        %v743 = vmax.f32 %v673, %v675
        %744 = vmax.xlane.f32.xlu0 %v743
        %v745 = vpop.xlane.xlu0 %744
        %v746 = vmax.f32 %v677, %v679
        %747 = vmax.xlane.f32.xlu0 %v746
        %v748 = vpop.xlane.xlu0 %747
        %v749 = vmax.f32 %v683, %v685
        %750 = vmax.xlane.f32.xlu0 %v749
        %v751 = vpop.xlane.xlu0 %750
        %v752 = vmax.f32 %v687, %v689
        %753 = vmax.xlane.f32.xlu0 %v752
        %v754 = vpop.xlane.xlu0 %753
        %v755 = vmax.f32 %v693, %v695
        %756 = vmax.xlane.f32.xlu0 %v755
        %v757 = vpop.xlane.xlu0 %756
        %v758 = vmax.f32 %v697, %v699
        %759 = vmax.xlane.f32.xlu0 %v758
        %v760 = vpop.xlane.xlu0 %759
        %v761 = vmax.f32 %v703, %v705
        %762 = vmax.xlane.f32.xlu0 %v761
        %v763 = vpop.xlane.xlu0 %762
        %v764 = vmax.f32 %v707, %v709
        %765 = vmax.xlane.f32.xlu0 %v764
        %v766 = vpop.xlane.xlu0 %765
        %v767 = vmax.f32 %v713, %v715
        %768 = vmax.xlane.f32.xlu0 %v767
        %v769 = vpop.xlane.xlu0 %768
        %v770 = vmax.f32 %v717, %v719
        %771 = vmax.xlane.f32.xlu0 %v770
        %v772 = vpop.xlane.xlu0 %771
        %v773 = vmax.f32 %v723, %v725
        %774 = vmax.xlane.f32.xlu0 %v773
        %v775 = vpop.xlane.xlu0 %774
        %v776 = vmax.f32 %v727, %v729
        %777 = vmax.xlane.f32.xlu0 %v776
        %v778 = vpop.xlane.xlu0 %777
        %v779 = vsub.f32 %v653, %v733
        %v780 = vsub.f32 %v655, %v733
        %v781 = vsub.f32 %v657, %v736
        %v782 = vsub.f32 %v659, %v736
        %v783 = vsub.f32 %v663, %v739
        %v784 = vsub.f32 %v665, %v739
        %v785 = vsub.f32 %v667, %v742
        %v786 = vsub.f32 %v669, %v742
        %v787 = vsub.f32 %v673, %v745
        %v788 = vsub.f32 %v675, %v745
        %v789 = vsub.f32 %v677, %v748
        %v790 = vsub.f32 %v679, %v748
        %v791 = vsub.f32 %v683, %v751
        %v792 = vsub.f32 %v685, %v751
        %v793 = vsub.f32 %v687, %v754
        %v794 = vsub.f32 %v689, %v754
        %v795 = vsub.f32 %v693, %v757
        %v796 = vsub.f32 %v695, %v757
        %v797 = vsub.f32 %v697, %v760
        %v798 = vsub.f32 %v699, %v760
        %v799 = vsub.f32 %v703, %v763
        %v800 = vsub.f32 %v705, %v763
        %v801 = vsub.f32 %v707, %v766
        %v802 = vsub.f32 %v709, %v766
        %v803 = vsub.f32 %v713, %v769
        %v804 = vsub.f32 %v715, %v769
        %v805 = vsub.f32 %v717, %v772
        %v806 = vsub.f32 %v719, %v772
        %v807 = vsub.f32 %v723, %v775
        %v808 = vsub.f32 %v725, %v775
        %v809 = vsub.f32 %v727, %v778
        %v810 = vsub.f32 %v729, %v778
        %v811 = vmul.f32 %v779, 1.442695
        %v812 = vpow.pop %v811
        %v813 = vmul.f32 %v780, 1.442695
        %v814 = vpow.pop %v813
        %v815 = vmul.f32 %v781, 1.442695
        %v816 = vpow.pop %v815
        %v817 = vmul.f32 %v782, 1.442695
        %v818 = vpow.pop %v817
        %v819 = vmul.f32 %v783, 1.442695
        %v820 = vpow.pop %v819
        %v821 = vmul.f32 %v784, 1.442695
        %v822 = vpow.pop %v821
        %v823 = vmul.f32 %v785, 1.442695
        %v824 = vpow.pop %v823
        %v825 = vmul.f32 %v786, 1.442695
        %v826 = vpow.pop %v825
        %v827 = vmul.f32 %v787, 1.442695
        %v828 = vpow.pop %v827
        %v829 = vmul.f32 %v788, 1.442695
        %v830 = vpow.pop %v829
        %v831 = vmul.f32 %v789, 1.442695
        %v832 = vpow.pop %v831
        %v833 = vmul.f32 %v790, 1.442695
        %v834 = vpow.pop %v833
        %v835 = vmul.f32 %v791, 1.442695
        %v836 = vpow.pop %v835
        %v837 = vmul.f32 %v792, 1.442695
        %v838 = vpow.pop %v837
        %v839 = vmul.f32 %v793, 1.442695
        %v840 = vpow.pop %v839
        %v841 = vmul.f32 %v794, 1.442695
        %v842 = vpow.pop %v841
        %v843 = vmul.f32 %v795, 1.442695
        %v844 = vpow.pop %v843
        %v845 = vmul.f32 %v796, 1.442695
        %v846 = vpow.pop %v845
        %v847 = vmul.f32 %v797, 1.442695
        %v848 = vpow.pop %v847
        %v849 = vmul.f32 %v798, 1.442695
        %v850 = vpow.pop %v849
        %v851 = vmul.f32 %v799, 1.442695
        %v852 = vpow.pop %v851
        %v853 = vmul.f32 %v800, 1.442695
        %v854 = vpow.pop %v853
        %v855 = vmul.f32 %v801, 1.442695
        %v856 = vpow.pop %v855
        %v857 = vmul.f32 %v802, 1.442695
        %v858 = vpow.pop %v857
        %v859 = vmul.f32 %v803, 1.442695
        %v860 = vpow.pop %v859
        %v861 = vmul.f32 %v804, 1.442695
        %v862 = vpow.pop %v861
        %v863 = vmul.f32 %v805, 1.442695
        %v864 = vpow.pop %v863
        %v865 = vmul.f32 %v806, 1.442695
        %v866 = vpow.pop %v865
        %v867 = vmul.f32 %v807, 1.442695
        %v868 = vpow.pop %v867
        %v869 = vmul.f32 %v808, 1.442695
        %v870 = vpow.pop %v869
        %v871 = vmul.f32 %v809, 1.442695
        %v872 = vpow.pop %v871
        %v873 = vmul.f32 %v810, 1.442695
        %v874 = vpow.pop %v873
        %v875 = vadd.f32 %v812, %v814
        %876 = vadd.xlane.f32.xlu0 %v875
        %v877 = vpop.xlane.xlu0 %876
        %v878 = vadd.f32 %v816, %v818
        %879 = vadd.xlane.f32.xlu0 %v878
        %v880 = vpop.xlane.xlu0 %879
        %v881 = vadd.f32 %v820, %v822
        %882 = vadd.xlane.f32.xlu0 %v881
        %v883 = vpop.xlane.xlu0 %882
        %v884 = vadd.f32 %v824, %v826
        %885 = vadd.xlane.f32.xlu0 %v884
        %v886 = vpop.xlane.xlu0 %885
        %v887 = vadd.f32 %v828, %v830
        %888 = vadd.xlane.f32.xlu0 %v887
        %v889 = vpop.xlane.xlu0 %888
        %v890 = vadd.f32 %v832, %v834
        %891 = vadd.xlane.f32.xlu0 %v890
        %v892 = vpop.xlane.xlu0 %891
        %v893 = vadd.f32 %v836, %v838
        %894 = vadd.xlane.f32.xlu0 %v893
        %v895 = vpop.xlane.xlu0 %894
        %v896 = vadd.f32 %v840, %v842
        %897 = vadd.xlane.f32.xlu0 %v896
        %v898 = vpop.xlane.xlu0 %897
        %v899 = vadd.f32 %v844, %v846
        %900 = vadd.xlane.f32.xlu0 %v899
        %v901 = vpop.xlane.xlu0 %900
        %v902 = vadd.f32 %v848, %v850
        %903 = vadd.xlane.f32.xlu0 %v902
        %v904 = vpop.xlane.xlu0 %903
        %v905 = vadd.f32 %v852, %v854
        %906 = vadd.xlane.f32.xlu0 %v905
        %v907 = vpop.xlane.xlu0 %906
        %v908 = vadd.f32 %v856, %v858
        %909 = vadd.xlane.f32.xlu0 %v908
        %v910 = vpop.xlane.xlu0 %909
        %v911 = vadd.f32 %v860, %v862
        %912 = vadd.xlane.f32.xlu0 %v911
        %v913 = vpop.xlane.xlu0 %912
        %v914 = vadd.f32 %v864, %v866
        %915 = vadd.xlane.f32.xlu0 %v914
        %v916 = vpop.xlane.xlu0 %915
        %v917 = vadd.f32 %v868, %v870
        %918 = vadd.xlane.f32.xlu0 %v917
        %v919 = vpop.xlane.xlu0 %918
        %v920 = vadd.f32 %v872, %v874
        %921 = vadd.xlane.f32.xlu0 %v920
        %v922 = vpop.xlane.xlu0 %921
        %v923 = vpack.c.bf16 %v816, %v812
        %v924 = vpack.c.bf16 %v818, %v814
        %v925 = vpack.c.bf16 %v824, %v820
        %v926 = vpack.c.bf16 %v826, %v822
        %v927 = vpack.c.bf16 %v832, %v828
        %v928 = vpack.c.bf16 %v834, %v830
        %v929 = vpack.c.bf16 %v840, %v836
        %v930 = vpack.c.bf16 %v842, %v838
        %v931 = vpack.c.bf16 %v848, %v844
        %v932 = vpack.c.bf16 %v850, %v846
        %v933 = vpack.c.bf16 %v856, %v852
        %v934 = vpack.c.bf16 %v858, %v854
        %v935 = vpack.c.bf16 %v864, %v860
        %v936 = vpack.c.bf16 %v866, %v862
        %v937 = vpack.c.bf16 %v872, %v868
        %v938 = vpack.c.bf16 %v874, %v870
        %939 = vmatprep.subr.bf16.mxu0 %v516
        %940 = vmatpush1.bf16.xpose.msra.mxu0 %v515
        %941 = vmatprep.subr.bf16.mxu0 0
        %942 = vmatpush1.bf16.xpose.msra.mxu0 0
        %943 = vmatprep.subr.bf16.mxu0 0
        %944 = vmatpush1.bf16.xpose.msra.mxu0 0
        %945 = vmatprep.subr.bf16.mxu0 0
        %946 = vmatpush1.bf16.xpose.msra.mxu0 0
        %947 = vmatprep.subr.bf16.mxu0 0
        %948 = vmatpush1.bf16.xpose.msra.mxu0 0
        %949 = vmatprep.subr.bf16.mxu0 0
        %950 = vmatpush1.bf16.xpose.msra.mxu0 0
        %951 = vmatprep.subr.bf16.mxu0 0
        %952 = vmatpush1.bf16.xpose.msra.mxu0 0
        %953 = vmatprep.subr.bf16.mxu0 0
        %954 = vmatpush1.bf16.xpose.msra.mxu0 0
        %955 = vmatprep.subr.bf16.mxu0 0
        %956 = vmatpush1.bf16.xpose.msra.mxu0 0
        %957 = vmatprep.subr.bf16.mxu0 0
        %958 = vmatpush1.bf16.xpose.msra.mxu0 0
        %959 = vmatprep.subr.bf16.mxu0 0
        %960 = vmatpush1.bf16.xpose.msra.mxu0 0
        %961 = vmatprep.subr.bf16.mxu0 0
        %962 = vmatpush1.bf16.xpose.msra.mxu0 0
        %963 = vmatprep.subr.bf16.mxu0 0
        %964 = vmatpush1.bf16.xpose.msra.mxu0 0
        %965 = vmatprep.subr.bf16.mxu0 0
        %966 = vmatpush1.bf16.xpose.msra.mxu0 0
        %967 = vmatprep.subr.bf16.mxu0 0
        %968 = vmatpush1.bf16.xpose.msra.mxu0 0
        %969 = vmatprep.subr.bf16.mxu0 0
        %970 = vmatpush1.bf16.xpose.msra.mxu0 0
        %971 = vmatprep.mubr.bf16.mxu0 %v924
        %972 = vmatmul.mubr.bf16.gmra.mrb[0].mxu0 %v923
        %v973 = vpop.f32.mrb[0].mxu0
        %v974 = vadd.f32 0.0, %v973
        %v975 = vpop.f32.mrb[0].mxu0
        %v976 = vpop.f32.mrb[0].mxu0
        %v977 = vadd.f32 0.0, %v976
        %v978 = vpop.f32.mrb[0].mxu0
        %979 = vmatprep.mubr.bf16.mxu0 %v926
        %980 = vmatmul.mubr.bf16.gmra.mrb[0].mxu0 %v925
        %v981 = vpop.f32.mrb[0].mxu0
        %v982 = vadd.f32 0.0, %v981
        %v983 = vpop.f32.mrb[0].mxu0
        %v984 = vpop.f32.mrb[0].mxu0
        %v985 = vadd.f32 0.0, %v984
        %v986 = vpop.f32.mrb[0].mxu0
        %987 = vmatprep.mubr.bf16.mxu0 %v928
        %988 = vmatmul.mubr.bf16.gmra.mrb[0].mxu0 %v927
        %v989 = vpop.f32.mrb[0].mxu0
        %v990 = vadd.f32 0.0, %v989
        %v991 = vpop.f32.mrb[0].mxu0
        %v992 = vpop.f32.mrb[0].mxu0
        %v993 = vadd.f32 0.0, %v992
        %v994 = vpop.f32.mrb[0].mxu0
        %995 = vmatprep.mubr.bf16.mxu0 %v930
        %996 = vmatmul.mubr.bf16.gmra.mrb[0].mxu0 %v929
        %v997 = vpop.f32.mrb[0].mxu0
        %v998 = vadd.f32 0.0, %v997
        %v999 = vpop.f32.mrb[0].mxu0
        %v1000 = vpop.f32.mrb[0].mxu0
        %v1001 = vadd.f32 0.0, %v1000
        %v1002 = vpop.f32.mrb[0].mxu0
        %1003 = vmatprep.mubr.bf16.mxu0 %v932
        %1004 = vmatmul.mubr.bf16.gmra.mrb[0].mxu0 %v931
        %v1005 = vpop.f32.mrb[0].mxu0
        %v1006 = vadd.f32 0.0, %v1005
        %v1007 = vpop.f32.mrb[0].mxu0
        %v1008 = vpop.f32.mrb[0].mxu0
        %v1009 = vadd.f32 0.0, %v1008
        %v1010 = vpop.f32.mrb[0].mxu0
        %1011 = vmatprep.mubr.bf16.mxu0 %v934
        %1012 = vmatmul.mubr.bf16.gmra.mrb[0].mxu0 %v933
        %v1013 = vpop.f32.mrb[0].mxu0
        %v1014 = vadd.f32 0.0, %v1013
        %v1015 = vpop.f32.mrb[0].mxu0
        %v1016 = vpop.f32.mrb[0].mxu0
        %v1017 = vadd.f32 0.0, %v1016
        %v1018 = vpop.f32.mrb[0].mxu0
        %1019 = vmatprep.mubr.bf16.mxu0 %v936
        %1020 = vmatmul.mubr.bf16.gmra.mrb[0].mxu0 %v935
        %v1021 = vpop.f32.mrb[0].mxu0
        %v1022 = vadd.f32 0.0, %v1021
        %v1023 = vpop.f32.mrb[0].mxu0
        %v1024 = vpop.f32.mrb[0].mxu0
        %v1025 = vadd.f32 0.0, %v1024
        %v1026 = vpop.f32.mrb[0].mxu0
        %1027 = vmatprep.mubr.bf16.mxu0 %v938
        %1028 = vmatmul.mubr.bf16.gmra.mrb[0].mxu0 %v937
        %v1029 = vpop.f32.mrb[0].mxu0
        %v1030 = vadd.f32 0.0, %v1029
        %v1031 = vpop.f32.mrb[0].mxu0
        %v1032 = vpop.f32.mrb[0].mxu0
        %v1033 = vadd.f32 0.0, %v1032
        %v1034 = vpop.f32.mrb[0].mxu0
        %1035 = vdwg.mxu0
        %v1036 = vrcp.pop %v877
        %v1037 = vrcp.pop %v880
        %v1038 = vrcp.pop %v883
        %v1039 = vrcp.pop %v886
        %v1040 = vrcp.pop %v889
        %v1041 = vrcp.pop %v892
        %v1042 = vrcp.pop %v895
        %v1043 = vrcp.pop %v898
        %v1044 = vrcp.pop %v901
        %v1045 = vrcp.pop %v904
        %v1046 = vrcp.pop %v907
        %v1047 = vrcp.pop %v910
        %v1048 = vrcp.pop %v913
        %v1049 = vrcp.pop %v916
        %v1050 = vrcp.pop %v919
        %v1051 = vrcp.pop %v922
        %v1052 = vmul.f32 %v974, %v1036
        %v1053 = vmul.f32 %v977, %v1037
        %v1054 = vmul.f32 %v982, %v1038
        %v1055 = vmul.f32 %v985, %v1039
        %v1056 = vmul.f32 %v990, %v1040
        %v1057 = vmul.f32 %v993, %v1041
        %v1058 = vmul.f32 %v998, %v1042
        %v1059 = vmul.f32 %v1001, %v1043
        %v1060 = vmul.f32 %v1006, %v1044
        %v1061 = vmul.f32 %v1009, %v1045
        %v1062 = vmul.f32 %v1014, %v1046
        %v1063 = vmul.f32 %v1017, %v1047
        %v1064 = vmul.f32 %v1022, %v1048
        %v1065 = vmul.f32 %v1025, %v1049
        %v1066 = vmul.f32 %v1030, %v1050
        %v1067 = vmul.f32 %v1033, %v1051
        %v1068 = vld [vmem:[#allocation13] sm:$0xff]
        %v1069 = vld [vmem:[#allocation13 + $0x8] sm:$0xff]
        %v1070 = vpack.c.bf16 %v1069, %v1068
        %v1071 = vpack.c.bf16 %v1053, %v1052
        %v1072 = vpack.c.bf16 %v1055, %v1054
        %v1073 = vpack.c.bf16 %v1057, %v1056
        %v1074 = vpack.c.bf16 %v1059, %v1058
        %v1075 = vpack.c.bf16 %v1061, %v1060
        %v1076 = vpack.c.bf16 %v1063, %v1062
        %v1077 = vpack.c.bf16 %v1065, %v1064
        %v1078 = vpack.c.bf16 %v1067, %v1066
        %v1080 = vsel %vm586, %v1070, 0
        %v1083 = vsel %vm586, %v1071, 0
        %v1086 = vsel %vm586, %v1072, 0
        %v1089 = vsel %vm586, %v1073, 0
        %v1092 = vsel %vm586, %v1074, 0
        %v1095 = vsel %vm586, %v1075, 0
        %v1098 = vsel %vm586, %v1076, 0
        %v1101 = vsel %vm586, %v1077, 0
        %v1104 = vsel %vm586, %v1078, 0
        %1106 = vmatprep.subr.bf16.mxu0 0
        %1107 = vmatpush1.bf16.xpose.msra.mxu0 %v1083
        %1108 = vmatprep.subr.bf16.mxu0 0
        %1109 = vmatpush1.bf16.xpose.msra.mxu0 %v1086
        %1110 = vmatprep.subr.bf16.mxu0 0
        %1111 = vmatpush1.bf16.xpose.msra.mxu0 %v1089
        %1112 = vmatprep.subr.bf16.mxu0 0
        %1113 = vmatpush1.bf16.xpose.msra.mxu0 %v1092
        %1114 = vmatprep.subr.bf16.mxu0 0
        %1115 = vmatpush1.bf16.xpose.msra.mxu0 %v1095
        %1116 = vmatprep.subr.bf16.mxu0 0
        %1117 = vmatpush1.bf16.xpose.msra.mxu0 %v1098
        %1118 = vmatprep.subr.bf16.mxu0 0
        %1119 = vmatpush1.bf16.xpose.msra.mxu0 %v1101
        %1120 = vmatprep.subr.bf16.mxu0 0
        %1121 = vmatpush1.bf16.xpose.msra.mxu0 %v1104
        %1122 = vmatprep.subr.bf16.mxu0 0
        %1123 = vmatpush1.bf16.xpose.msra.mxu0 0
        %1124 = vmatprep.subr.bf16.mxu0 0
        %1125 = vmatpush1.bf16.xpose.msra.mxu0 0
        %1126 = vmatprep.subr.bf16.mxu0 0
        %1127 = vmatpush1.bf16.xpose.msra.mxu0 0
        %1128 = vmatprep.subr.bf16.mxu0 0
        %1129 = vmatpush1.bf16.xpose.msra.mxu0 0
        %1130 = vmatprep.subr.bf16.mxu0 0
        %1131 = vmatpush1.bf16.xpose.msra.mxu0 0
        %1132 = vmatprep.subr.bf16.mxu0 0
        %1133 = vmatpush1.bf16.xpose.msra.mxu0 0
        %1134 = vmatprep.subr.bf16.mxu0 0
        %1135 = vmatpush1.bf16.xpose.msra.mxu0 0
        %1136 = vmatprep.subr.bf16.mxu0 0
        %1137 = vmatpush1.bf16.xpose.msra.mxu0 0
        %1138 = vmatprep.mubr.bf16.mxu0 0
        %1139 = vmatmul.mubr.bf16.gmra.mrb[0].mxu0 %v1080
        %v1140 = vpop.f32.mrb[0].mxu0
        %v1141 = vadd.f32 0.0, %v1140
        %v1142 = vpop.f32.mrb[0].mxu0
        %v1143 = vpop.f32.mrb[0].mxu0
        %v1144 = vadd.f32 0.0, %v1143
        %v1145 = vpop.f32.mrb[0].mxu0
        %1146 = vdwg.mxu0
        %v1147 = vadd.f32 %v521, %v1141
        %v1148 = vadd.f32 %v522, %v1144
        %1149 = vst [vmem:[%s447] sm:$0xff] %v1147
        %1150 = vst [vmem:[%s447 + $0x8] sm:$0xff] %v1148
        %s1151 = sand.u32 %s217, 1
        %s1152 = scalar_lea.sflag [#allocation4], %s1151
        %s1153 = sand.u32 %s217, 1
        %s1154 = smul.addr %s1153, 16
        %s1155 = scalar_lea.vmem [#allocation14], %s1154
        // Predicated region
        $region77: #{tpu_custom_call.1} parent=47 // pred_check
          %p1156 = pneg %p227
        $region78: #{tpu_custom_call.1} parent=47 // pred_check_branch
          %1158 = sbr.rel (%p1156) target = $region80
        $region79: #{tpu_custom_call.1} parent=47 // pred_region
          %s1160 = ssub.s32 256, 256
          %1161 = vsyncadd %s1152, %s1160
          %s1162 = smul.addr %s35, 4
          %s1163 = sadd.s32 %s36, %s1162
          %s1164 = smul.addr %s1163, 128
          %s1165 = scalar_lea.hbm %s7, %s1164
          %s1166 = sshll.u32 %s1155, 4
          %s1167 = int_to_ptr.vmem [resolvable:$true] %s1166
          %1172 = dma.vmem_to_hbm [thread:$0]  %s1167, 256, %s1165, %s1152, 128, 256, 8
        $region80: #{tpu_custom_call.1} parent=47 // pred_fallthru
          _
      $region48: #{tpu_custom_call.1} parent=5 // pred_fallthru
        _
      %p1173 = scmp.le.s32.totalorder 2, %s26
      // Predicated region
      $region81: #{tpu_custom_call.1} parent=5 // pred_check
        %p1174 = pneg %p1173
      $region82: #{tpu_custom_call.1} parent=5 // pred_check_branch
        %1176 = sbr.rel (%p1174) target = $region84
      $region83: #{tpu_custom_call.1} parent=5 // pred_region
        %s1177 = ssub.s32 %s26, 2
        // Predicated region
        $region85: #{tpu_custom_call.1} parent=83 // pred_check
          %p1178 = pneg %p233
        $region86: #{tpu_custom_call.1} parent=83 // pred_check_branch
          %1180 = sbr.rel (%p1178) target = $region88
        $region87: #{tpu_custom_call.1} parent=83 // pred_region
          %s1181 = sand.u32 %s218, 1
          %s1182 = scalar_lea.sflag [#allocation4], %s1181
          %s1183 = sand.u32 %s218, 1
          %s1184 = smul.addr %s1183, 16
          %s1185 = scalar_lea.vmem [#allocation14], %s1184
          %1186 = dma.done %s1182, 256
        $region88: #{tpu_custom_call.1} parent=83 // pred_fallthru
          _
      $region84: #{tpu_custom_call.1} parent=5 // pred_fallthru
        _
    $region6: #{tpu_custom_call.1} parent=1 // loop_footer
      %s30 = sadd.s32 1, %s26
    $region7: #{tpu_custom_call.1} parent=1 // loop_footer_branch
      %25 = sbr.rel target = $region3
    $region8: #{tpu_custom_call.1} parent=1 // loop_exit
      _
    %1187 = vsyncpa [#allocation3], 1
    %s1188 = scalar_lea.sflag [#allocation3], 1
    %1189 = vsyncpa %s1188, 1
    %1190 = vsyncpa [#allocation6], 1
    %s1191 = scalar_lea.sflag [#allocation6], 1
    %1192 = vsyncpa %s1191, 1
    %1193 = vsyncpa [#allocation9], 1
    %s1194 = scalar_lea.sflag [#allocation9], 1
    %1195 = vsyncpa %s1194, 1
    %1196 = vsyncpa [#allocation12], 1
    %1197 = vsyncpa [#allocation4], 1
    %s1198 = scalar_lea.sflag [#allocation4], 1
    %1199 = vsyncpa %s1198, 1

</llo_original>
